<compile_context>
chip_gen: v7x
topology: tpu7x:2x2x1
jax: 0.10.0
libtpu: 0.0.40
codegen_flags: <defaults>
</compile_context>

<pallas_src>
import functools

import jax
import jax.numpy as jnp
from jax.experimental import pallas as pl
from jax.experimental.pallas import tpu as pltpu


def _round_up(n, m):
    return ((n + m - 1) // m) * m


def _cdiv(a, b):
    return (a + b - 1) // b


def mlp_kernel(x_ref, w1_ref, b1_ref, w2_ref, b2_ref, o_ref):
    # x arrives as f32; cast to bf16 on the VPU (free filler under DMA/MXU).
    x_bf16 = x_ref[...].astype(jnp.bfloat16)
    # fc1: [tm, D](bf16) @ [D, H](bf16) -> f32 accumulator.
    h = jnp.dot(x_bf16, w1_ref[...], preferred_element_type=jnp.float32)
    # bias + ReLU in f32 (keep epilogue f32 — important on v5e: no bf16 VPU).
    h = jnp.maximum(h + b1_ref[...], 0.0)
    # fc2: cast hidden activation to bf16 only for the MXU; accumulate in f32.
    out = jnp.dot(h.astype(w2_ref.dtype), w2_ref[...],
                  preferred_element_type=jnp.float32)
    o_ref[...] = (out + b2_ref[...]).astype(o_ref.dtype)


def prepare_params(w1, b1, w2, b2):
    """One-time constant prep (hoisted out of the per-call path).

    w1: [D, H], b1: [1, H], w2: [H, C], b2: [1, C].
    Returns bf16 weights, f32 biases, with the class dim zero-padded to a
    multiple of 128 (lane-dense output stores).
    """
    C = w2.shape[1]
    Cp = _round_up(max(C, 128), 128)
    w1b = w1.astype(jnp.bfloat16)
    b1f = b1.astype(jnp.float32)
    w2b = jnp.pad(w2, ((0, 0), (0, Cp - C))).astype(jnp.bfloat16)
    b2p = jnp.pad(b2, ((0, 0), (0, Cp - C))).astype(jnp.float32)
    return dict(w1=w1b, b1=b1f, w2=w2b, b2=b2p, num_classes=C)


def _choose_tiling(B):
    """Pick (tm, Bp).

    Small batch: one tile (grid=(1,)); the work is tiny, one idle TC on v7x
    is acceptable. Large batch: big tiles (up to 4096 rows) to amortize the
    ~0.35 us/step pipeline overhead and hit the HBM roofline, while
      * keeping >= 2 grid steps so v7x megacore can split the batch axis, and
      * capping padded-tail waste (tm sized from cdiv(B, n_tiles)).
    """
    if B <= 512:
        tm = _round_up(B, 16)
        return tm, tm
    tm_max = 4096
    n_tiles = max(2, _cdiv(B, tm_max))          # >= 2 steps for v7x megacore
    tm = min(tm_max, _round_up(_cdiv(B, n_tiles), 256))
    Bp = _round_up(B, tm)
    return tm, Bp


def neural_net_forward(x, params):
    """x: [B, D] f32, params: output of prepare_params()."""
    B, D = x.shape
    w1, b1, w2, b2 = params["w1"], params["b1"], params["w2"], params["b2"]
    H = w1.shape[1]
    Cp = w2.shape[1]
    C = params["num_classes"]

    tm, Bp = _choose_tiling(B)

    # Only batch padding happens per-call; x stays f32 (cast is in-kernel).
    xp = x if Bp == B else jnp.pad(x, ((0, Bp - B), (0, 0)))

    grid = (Bp // tm,)

    # VMEM budget: double-buffered x/out tiles + f32/bf16 hidden temps +
    # resident weights; sized explicitly so a large tm stays safe on v7x
    # (64 MiB physical VMEM).
    vmem_bytes = (
        2 * tm * D * 4          # x tiles (f32, double buffered)
        + 2 * tm * Cp * 4       # out tiles (f32, double buffered)
        + 2 * tm * H * 4        # hidden f32 + bf16 temporaries (upper bound)
        + 4 * (D * H + H * Cp + H + Cp) * 2
    )
    vmem_limit = min(max(int(vmem_bytes * 1.5) + (8 << 20), 32 << 20), 56 << 20)

    cost = pl.CostEstimate(
        flops=2 * Bp * (D * H + H * Cp),
        transcendentals=0,
        bytes_accessed=(Bp * D * 4          # x (f32 in)
                        + D * H * 2         # W1 (bf16)
                        + H * Cp * 2        # W2 (bf16)
                        + (H + Cp) * 4      # biases
                        + Bp * Cp * 4),     # out (f32)
    )

    out_padded = pl.pallas_call(
        mlp_kernel,
        out_shape=jax.ShapeDtypeStruct((Bp, Cp), jnp.float32),
        grid=grid,
        in_specs=[
            pl.BlockSpec((tm, D), lambda i: (i, 0)),    # x tile over batch
            pl.BlockSpec((D, H), lambda i: (0, 0)),     # W1 (resident)
            pl.BlockSpec((1, H), lambda i: (0, 0)),     # b1
            pl.BlockSpec((H, Cp), lambda i: (0, 0)),    # W2 (resident, padded)
            pl.BlockSpec((1, Cp), lambda i: (0, 0)),    # b2 (padded)
        ],
        out_specs=pl.BlockSpec((tm, Cp), lambda i: (i, 0)),
        compiler_params=pltpu.CompilerParams(
            dimension_semantics=("parallel",),
            vmem_limit_bytes=vmem_limit,
        ),
        cost_estimate=cost,
    )(xp, w1, b1, w2, b2)

    # TODO(synk): for throughput-critical pipelines, keep the lane-padded
    # (Bp, 128) layout downstream (or emit bf16) instead of this f32 slice.
    return out_padded[:B, :C]


def init_params(key, input_size, hidden, num_classes):
    # Mimic torch nn.Linear default init: U(-1/sqrt(fan_in), 1/sqrt(fan_in)).
    k1, k2, k3, k4 = jax.random.split(key, 4)
    bound1 = 1.0 / jnp.sqrt(input_size)
    bound2 = 1.0 / jnp.sqrt(hidden)
    w1 = jax.random.uniform(k1, (input_size, hidden), jnp.float32, -bound1, bound1)
    b1 = jax.random.uniform(k2, (1, hidden), jnp.float32, -bound1, bound1)
    w2 = jax.random.uniform(k3, (hidden, num_classes), jnp.float32, -bound2, bound2)
    b2 = jax.random.uniform(k4, (1, num_classes), jnp.float32, -bound2, bound2)
    return w1, b1, w2, b2


if __name__ == "__main__":
    input_size = 32     # data.shape[1]
    hidden = 128        # fc1 output size (fixed by the module)
    num_classes = 8
    batch = 16

    key = jax.random.PRNGKey(0)
    kx, kp = jax.random.split(key)
    x = jax.random.normal(kx, (batch, input_size), jnp.float32)
    w1, b1, w2, b2 = init_params(kp, input_size, hidden, num_classes)

    # Constant prep done once (hoisted out of the per-call path).
    params = prepare_params(w1, b1, w2, b2)

    fwd = jax.jit(functools.partial(neural_net_forward, params=params))
    out = jax.block_until_ready(fwd(x))
    assert out.shape == (batch, num_classes)

    # Reference consistent with the kernel's bf16-input / f32-accumulate math.
    xb = x.astype(jnp.bfloat16).astype(jnp.float32)
    w1b = w1.astype(jnp.bfloat16).astype(jnp.float32)
    w2b = w2.astype(jnp.bfloat16).astype(jnp.float32)
    h_ref = jnp.maximum(xb @ w1b + b1, 0.0)
    ref = h_ref.astype(jnp.bfloat16).astype(jnp.float32) @ w2b + b2
    assert jnp.allclose(out, ref, atol=2e-3, rtol=2e-3)

    # Loose check against the pure-f32 module semantics (bf16 rounding only).
    ref_f32 = jnp.maximum(x @ w1 + b1, 0.0) @ w2 + b2
    assert jnp.allclose(out, ref_f32, atol=5e-2, rtol=5e-2)

    print("KERNEL_OK")
</pallas_src>

<mosaic_0001>
module attributes {stable_mosaic.version = 11 : i64} {
  func.func @mlp_kernel(%arg0: i32, %arg1: memref<16x32xf32, #tpu.memory_space<vmem>>, %arg2: memref<32x128xbf16, #tpu.memory_space<vmem>>, %arg3: memref<1x128xf32, #tpu.memory_space<vmem>>, %arg4: memref<128x128xbf16, #tpu.memory_space<vmem>>, %arg5: memref<1x128xf32, #tpu.memory_space<vmem>>, %arg6: memref<16x128xf32, #tpu.memory_space<vmem>>) attributes {dimension_semantics = [#tpu.dimension_semantics<parallel>], iteration_bounds = array<i64: 1>, scalar_prefetch = 0 : i64, scratch_operands = 0 : i64, tpu.core_type = #tpu.core_type<tc>, window_params = [{transform_indices = @transform_0, window_bounds = array<i64: 16, 32>}, {pipeline_mode = #tpu.pipeline_mode<synchronous>, transform_indices = @transform_1, window_bounds = array<i64: 32, 128>}, {pipeline_mode = #tpu.pipeline_mode<synchronous>, transform_indices = @transform_2, window_bounds = array<i64: 1, 128>}, {pipeline_mode = #tpu.pipeline_mode<synchronous>, transform_indices = @transform_3, window_bounds = array<i64: 128, 128>}, {pipeline_mode = #tpu.pipeline_mode<synchronous>, transform_indices = @transform_4, window_bounds = array<i64: 1, 128>}, {transform_indices = @transform_5, window_bounds = array<i64: 16, 128>}]} {
    %c0 = arith.constant 0 : index
    %c0_0 = arith.constant 0 : index
    %0 = vector.load %arg1[%c0, %c0_0] : memref<16x32xf32, #tpu.memory_space<vmem>>, vector<16x32xf32>
    %1 = arith.truncf %0 : vector<16x32xf32> to vector<16x32xbf16>
    %c0_1 = arith.constant 0 : index
    %c0_2 = arith.constant 0 : index
    %2 = vector.load %arg2[%c0_1, %c0_2] : memref<32x128xbf16, #tpu.memory_space<vmem>>, vector<32x128xbf16>
    %cst = arith.constant dense<0.000000e+00> : vector<16x128xf32>
    %3 = tpu.matmul %1, %2, %cst {dimension_numbers = #tpu.dot_dimension_numbers<[1], [0], [0], [1], [0, 0, 1, 1], [], []>} : vector<16x32xbf16>, vector<32x128xbf16>, vector<16x128xf32> -> vector<16x128xf32>
    %c0_3 = arith.constant 0 : index
    %c0_4 = arith.constant 0 : index
    %4 = vector.load %arg3[%c0_3, %c0_4] : memref<1x128xf32, #tpu.memory_space<vmem>>, vector<1x128xf32>
    %5 = vector.broadcast %4 : vector<1x128xf32> to vector<16x128xf32>
    %6 = arith.addf %3, %5 : vector<16x128xf32>
    %cst_5 = arith.constant 0.000000e+00 : f32
    %7 = vector.broadcast %cst_5 : f32 to vector<16x128xf32>
    %8 = arith.maximumf %6, %7 : vector<16x128xf32>
    %9 = arith.truncf %8 : vector<16x128xf32> to vector<16x128xbf16>
    %c0_6 = arith.constant 0 : index
    %c0_7 = arith.constant 0 : index
    %10 = vector.load %arg4[%c0_6, %c0_7] : memref<128x128xbf16, #tpu.memory_space<vmem>>, vector<128x128xbf16>
    %cst_8 = arith.constant dense<0.000000e+00> : vector<16x128xf32>
    %11 = tpu.matmul %9, %10, %cst_8 {dimension_numbers = #tpu.dot_dimension_numbers<[1], [0], [0], [1], [0, 0, 1, 1], [], []>} : vector<16x128xbf16>, vector<128x128xbf16>, vector<16x128xf32> -> vector<16x128xf32>
    %c0_9 = arith.constant 0 : index
    %c0_10 = arith.constant 0 : index
    %12 = vector.load %arg5[%c0_9, %c0_10] : memref<1x128xf32, #tpu.memory_space<vmem>>, vector<1x128xf32>
    %13 = vector.broadcast %12 : vector<1x128xf32> to vector<16x128xf32>
    %14 = arith.addf %11, %13 : vector<16x128xf32>
    %c0_11 = arith.constant 0 : index
    %c0_12 = arith.constant 0 : index
    %15 = vector.load %arg6[%c0_11, %c0_12] : memref<16x128xf32, #tpu.memory_space<vmem>>, vector<16x128xf32>
    tpu.vector_store %arg6[%c0_11, %c0_12], %14 {strides = array<i32>} : memref<16x128xf32, #tpu.memory_space<vmem>>, vector<16x128xf32>,
    return
  }
  func.func @transform_0(%arg0: i32) -> (i32, i32) {
    %c0_i32 = arith.constant 0 : i32
    %c0_i32_0 = arith.constant 0 : i32
    return %arg0, %c0_i32 : i32, i32
  }
  func.func @transform_1(%arg0: i32) -> (i32, i32) {
    %c0_i32 = arith.constant 0 : i32
    %c0_i32_0 = arith.constant 0 : i32
    %c0_i32_1 = arith.constant 0 : i32
    return %c0_i32, %c0_i32_0 : i32, i32
  }
  func.func @transform_2(%arg0: i32) -> (i32, i32) {
    %c0_i32 = arith.constant 0 : i32
    %c0_i32_0 = arith.constant 0 : i32
    %c0_i32_1 = arith.constant 0 : i32
    return %c0_i32, %c0_i32_0 : i32, i32
  }
  func.func @transform_3(%arg0: i32) -> (i32, i32) {
    %c0_i32 = arith.constant 0 : i32
    %c0_i32_0 = arith.constant 0 : i32
    %c0_i32_1 = arith.constant 0 : i32
    return %c0_i32, %c0_i32_0 : i32, i32
  }
  func.func @transform_4(%arg0: i32) -> (i32, i32) {
    %c0_i32 = arith.constant 0 : i32
    %c0_i32_0 = arith.constant 0 : i32
    %c0_i32_1 = arith.constant 0 : i32
    return %c0_i32, %c0_i32_0 : i32, i32
  }
  func.func @transform_5(%arg0: i32) -> (i32, i32) {
    %c0_i32 = arith.constant 0 : i32
    %c0_i32_0 = arith.constant 0 : i32
    return %arg0, %c0_i32 : i32, i32
  }
}

</mosaic_0001>

<llo_original>
// kernel: neural_net_forward.1
$region0: #{neural_net_forward.1}
  #allocation0 [shape = 'u32[]', space=smem, size = 0x4, offset = 0x4, fixed_abs, tag = 'smem constant byte address 0x4 - core index']
  #allocation1 [shape = 'u32[144,128]{1,0:T(1,128)}', space=vmem, size = 0x12000, scoped, tag = 'internal scratch']
  %s0 = inlined_call_operand.hbm [shape: f32[16,32], index: 0, kind: input, shape index: {}]
  %s1 = inlined_call_operand.vmem [shape: bf16[32,128], index: 1, kind: input, shape index: {}]
  %s2 = inlined_call_operand.vmem [shape: f32[1,128], index: 2, kind: input, shape index: {}]
  %s3 = inlined_call_operand.hbm [shape: bf16[128,128], index: 3, kind: input, shape index: {}]
  %s4 = inlined_call_operand.vmem [shape: f32[1,128], index: 4, kind: input, shape index: {}]
  %s5 = inlined_call_operand.vmem [shape: f32[16,128], index: 5, kind: output, shape index: {}]
  %s6 = sld [smem:[#allocation0]]
  $region38: #{neural_net_forward.1} parent=0
    _
  %s8 = ssub.s32 1, %s6
  %s9 = scalar_select 0, %s8, %s6
  $region1: #{neural_net_forward.1} parent=0
    #allocation2 [shape = 'u8[8192]{0}', space=vmem, size = 0x2000, scoped, tag = 'input window, operand 0, single buffered']
    #allocation3 [shape = 's32[1]{0}', space=sflag, size = 0x4, scoped, tag = 'scoped memory for neural_net_forward.1']
    #allocation4 [shape = 'u8[32768]{0}', space=vmem, size = 0x8000, scoped, tag = 'input window, operand 3, single buffered']
    #allocation5 [shape = 's32[1]{0}', space=sflag, size = 0x4, scoped, tag = 'scoped memory for neural_net_forward.1']
    %10 = vsyncpa [#allocation3], 0
    %11 = vsyncpa [#allocation5], 0
    // Predicated region
    $region2: #{neural_net_forward.1} parent=1 // pred_check
      _
    $region3: #{neural_net_forward.1} parent=1 // pred_check_branch
      %13 = sbr.rel (0) target = $region5
    $region4: #{neural_net_forward.1} parent=1 // pred_region
      %s15 = ssub.s32 256, 256
      %16 = vsyncadd [#allocation3], %s15
      %s17 = sshll.u32 [#allocation2], 4
      %s18 = int_to_ptr.vmem [resolvable:$true] %s17
      %23 = dma.hbm_to_vmem [thread:$0]  %s0, 256, %s18, [#allocation3], 128, 128, 8
    $region5: #{neural_net_forward.1} parent=1 // pred_fallthru
      _
    // Predicated region
    $region6: #{neural_net_forward.1} parent=1 // pred_check
      _
    $region7: #{neural_net_forward.1} parent=1 // pred_check_branch
      %25 = sbr.rel (0) target = $region9
    $region8: #{neural_net_forward.1} parent=1 // pred_region
      _
    $region9: #{neural_net_forward.1} parent=1 // pred_fallthru
      _
    // Predicated region
    $region10: #{neural_net_forward.1} parent=1 // pred_check
      _
    $region11: #{neural_net_forward.1} parent=1 // pred_check_branch
      %27 = sbr.rel (0) target = $region13
    $region12: #{neural_net_forward.1} parent=1 // pred_region
      _
    $region13: #{neural_net_forward.1} parent=1 // pred_fallthru
      _
    // Predicated region
    $region14: #{neural_net_forward.1} parent=1 // pred_check
      _
    $region15: #{neural_net_forward.1} parent=1 // pred_check_branch
      %29 = sbr.rel (0) target = $region17
    $region16: #{neural_net_forward.1} parent=1 // pred_region
      %s31 = ssub.s32 1024, 1024
      %32 = vsyncadd [#allocation5], %s31
      %s33 = sshll.u32 [#allocation4], 4
      %s34 = int_to_ptr.vmem [resolvable:$true] %s33
      %39 = dma.hbm_to_vmem [thread:$0]  %s3, 1024, %s34, [#allocation5], 64, 64, 4
    $region17: #{neural_net_forward.1} parent=1 // pred_fallthru
      _
    // Predicated region
    $region18: #{neural_net_forward.1} parent=1 // pred_check
      _
    $region19: #{neural_net_forward.1} parent=1 // pred_check_branch
      %41 = sbr.rel (0) target = $region21
    $region20: #{neural_net_forward.1} parent=1 // pred_region
      _
    $region21: #{neural_net_forward.1} parent=1 // pred_fallthru
      _
    // Predicated region
    $region22: #{neural_net_forward.1} parent=1 // pred_check
      _
    $region23: #{neural_net_forward.1} parent=1 // pred_check_branch
      %43 = sbr.rel (0) target = $region25
    $region24: #{neural_net_forward.1} parent=1 // pred_region
      %44 = dma.done [#allocation3], 256
    $region25: #{neural_net_forward.1} parent=1 // pred_fallthru
      _
    // Predicated region
    $region26: #{neural_net_forward.1} parent=1 // pred_check
      _
    $region27: #{neural_net_forward.1} parent=1 // pred_check_branch
      %46 = sbr.rel (0) target = $region29
    $region28: #{neural_net_forward.1} parent=1 // pred_region
      %47 = dma.done [#allocation5], 1024
    $region29: #{neural_net_forward.1} parent=1 // pred_fallthru
      _
    %v49 = vld [vmem:[#allocation2] sm:$0xff]
    %v50 = vld [vmem:[#allocation2 + $0x8] sm:$0xff]
    %v51 = vpack.c.bf16 %v50, %v49
    %v52 = vld [vmem:[%s1] sm:$0xf]
    %v53 = vld [vmem:[%s1 + $0x4] sm:$0xf]
    %v54 = vld [vmem:[%s1 + $0x8] sm:$0xf]
    %v55 = vld [vmem:[%s1 + $0xc] sm:$0xf]
    %v56 = vld [vmem:[%s2] sm:$0x1]
    %v58 = vlaneseq
    %v59 = vshrl.u32 %v58, 7
    %v60 = vsub.s32 0, %v59
    %v61 = vrot.slane %v56, %v60
    %v67 = vunpack.c.l.b16 %v52
    %v68 = vunpack.c.l.b16 %v53
    %v69 = vunpack.c.l.b16 %v54
    %v70 = vunpack.c.l.b16 %v55
    %v71 = vpack.c.b16 %v68, %v67
    %v72 = vpack.c.b16 %v70, %v69
    %vm75 = vcmask 261120
    %v77 = vsel %vm75, %v51, 0
    %79 = vmatprep.subr.bf16.mxu0 0
    %80 = vmatpush1.bf16.msra.mxu0 %v71
    %81 = vmatprep.subr.bf16.mxu0 0
    %82 = vmatpush1.bf16.msra.mxu0 %v72
    %83 = vmatprep.subr.bf16.mxu0 0
    %84 = vmatpush1.bf16.msra.mxu0 0
    %85 = vmatprep.subr.bf16.mxu0 0
    %86 = vmatpush1.bf16.msra.mxu0 0
    %87 = vmatprep.subr.bf16.mxu0 0
    %88 = vmatpush1.bf16.msra.mxu0 0
    %89 = vmatprep.subr.bf16.mxu0 0
    %90 = vmatpush1.bf16.msra.mxu0 0
    %91 = vmatprep.subr.bf16.mxu0 0
    %92 = vmatpush1.bf16.msra.mxu0 0
    %93 = vmatprep.subr.bf16.mxu0 0
    %94 = vmatpush1.bf16.msra.mxu0 0
    %95 = vmatprep.subr.bf16.mxu0 0
    %96 = vmatpush1.bf16.msra.mxu0 0
    %97 = vmatprep.subr.bf16.mxu0 0
    %98 = vmatpush1.bf16.msra.mxu0 0
    %99 = vmatprep.subr.bf16.mxu0 0
    %100 = vmatpush1.bf16.msra.mxu0 0
    %101 = vmatprep.subr.bf16.mxu0 0
    %102 = vmatpush1.bf16.msra.mxu0 0
    %103 = vmatprep.subr.bf16.mxu0 0
    %104 = vmatpush1.bf16.msra.mxu0 0
    %105 = vmatprep.subr.bf16.mxu0 0
    %106 = vmatpush1.bf16.msra.mxu0 0
    %107 = vmatprep.subr.bf16.mxu0 0
    %108 = vmatpush1.bf16.msra.mxu0 0
    %109 = vmatprep.subr.bf16.mxu0 0
    %110 = vmatpush1.bf16.msra.mxu0 0
    %111 = vmatprep.mubr.bf16.mxu0 0
    %112 = vmatmul.mubr.bf16.gmra.mrb[0].mxu0 %v77
    %v113 = vpop.f32.mrb[0].mxu0
    %v114 = vadd.f32 %v61, %v113
    %v115 = vpop.f32.mrb[0].mxu0
    %v116 = vpop.f32.mrb[0].mxu0
    %v117 = vadd.f32 %v61, %v116
    %v118 = vpop.f32.mrb[0].mxu0
    %119 = vdwg.mxu0
    %v120 = vmax.f32 %v114, 0.0
    %v121 = vmax.f32 %v117, 0.0
    %v122 = vpack.c.bf16 %v121, %v120
    %v123 = vld [vmem:[#allocation4] sm:$0xf]
    %v124 = vld [vmem:[#allocation4 + $0x4] sm:$0xf]
    %v125 = vld [vmem:[#allocation4 + $0x8] sm:$0xf]
    %v126 = vld [vmem:[#allocation4 + $0xc] sm:$0xf]
    %v127 = vld [vmem:[#allocation4 + $0x10] sm:$0xf]
    %v128 = vld [vmem:[#allocation4 + $0x14] sm:$0xf]
    %v129 = vld [vmem:[#allocation4 + $0x18] sm:$0xf]
    %v130 = vld [vmem:[#allocation4 + $0x1c] sm:$0xf]
    %v131 = vld [vmem:[#allocation4 + $0x20] sm:$0xf]
    %v132 = vld [vmem:[#allocation4 + $0x24] sm:$0xf]
    %v133 = vld [vmem:[#allocation4 + $0x28] sm:$0xf]
    %v134 = vld [vmem:[#allocation4 + $0x2c] sm:$0xf]
    %v135 = vld [vmem:[#allocation4 + $0x30] sm:$0xf]
    %v136 = vld [vmem:[#allocation4 + $0x34] sm:$0xf]
    %v137 = vld [vmem:[#allocation4 + $0x38] sm:$0xf]
    %v138 = vld [vmem:[#allocation4 + $0x3c] sm:$0xf]
    %v139 = vld [vmem:[%s4] sm:$0x1]
    %v141 = vlaneseq
    %v142 = vshrl.u32 %v141, 7
    %v143 = vsub.s32 0, %v142
    %v144 = vrot.slane %v139, %v143
    %v162 = vunpack.c.l.b16 %v123
    %v163 = vunpack.c.l.b16 %v124
    %v164 = vunpack.c.l.b16 %v125
    %v165 = vunpack.c.l.b16 %v126
    %v166 = vunpack.c.l.b16 %v127
    %v167 = vunpack.c.l.b16 %v128
    %v168 = vunpack.c.l.b16 %v129
    %v169 = vunpack.c.l.b16 %v130
    %v170 = vunpack.c.l.b16 %v131
    %v171 = vunpack.c.l.b16 %v132
    %v172 = vunpack.c.l.b16 %v133
    %v173 = vunpack.c.l.b16 %v134
    %v174 = vunpack.c.l.b16 %v135
    %v175 = vunpack.c.l.b16 %v136
    %v176 = vunpack.c.l.b16 %v137
    %v177 = vunpack.c.l.b16 %v138
    %v178 = vpack.c.b16 %v163, %v162
    %v179 = vpack.c.b16 %v165, %v164
    %v180 = vpack.c.b16 %v167, %v166
    %v181 = vpack.c.b16 %v169, %v168
    %v182 = vpack.c.b16 %v171, %v170
    %v183 = vpack.c.b16 %v173, %v172
    %v184 = vpack.c.b16 %v175, %v174
    %v185 = vpack.c.b16 %v177, %v176
    %194 = vmatprep.subr.bf16.mxu0 0
    %195 = vmatpush1.bf16.msra.mxu0 %v178
    %196 = vmatprep.subr.bf16.mxu0 0
    %197 = vmatpush1.bf16.msra.mxu0 %v179
    %198 = vmatprep.subr.bf16.mxu0 0
    %199 = vmatpush1.bf16.msra.mxu0 %v180
    %200 = vmatprep.subr.bf16.mxu0 0
    %201 = vmatpush1.bf16.msra.mxu0 %v181
    %202 = vmatprep.subr.bf16.mxu0 0
    %203 = vmatpush1.bf16.msra.mxu0 %v182
    %204 = vmatprep.subr.bf16.mxu0 0
    %205 = vmatpush1.bf16.msra.mxu0 %v183
    %206 = vmatprep.subr.bf16.mxu0 0
    %207 = vmatpush1.bf16.msra.mxu0 %v184
    %208 = vmatprep.subr.bf16.mxu0 0
    %209 = vmatpush1.bf16.msra.mxu0 %v185
    %210 = vmatprep.subr.bf16.mxu0 0
    %211 = vmatpush1.bf16.msra.mxu0 0
    %212 = vmatprep.subr.bf16.mxu0 0
    %213 = vmatpush1.bf16.msra.mxu0 0
    %214 = vmatprep.subr.bf16.mxu0 0
    %215 = vmatpush1.bf16.msra.mxu0 0
    %216 = vmatprep.subr.bf16.mxu0 0
    %217 = vmatpush1.bf16.msra.mxu0 0
    %218 = vmatprep.subr.bf16.mxu0 0
    %219 = vmatpush1.bf16.msra.mxu0 0
    %220 = vmatprep.subr.bf16.mxu0 0
    %221 = vmatpush1.bf16.msra.mxu0 0
    %222 = vmatprep.subr.bf16.mxu0 0
    %223 = vmatpush1.bf16.msra.mxu0 0
    %224 = vmatprep.subr.bf16.mxu0 0
    %225 = vmatpush1.bf16.msra.mxu0 0
    %226 = vmatprep.mubr.bf16.mxu0 0
    %227 = vmatmul.mubr.bf16.gmra.mrb[0].mxu0 %v122
    %v228 = vpop.f32.mrb[0].mxu0
    %v229 = vadd.f32 %v144, %v228
    %v230 = vpop.f32.mrb[0].mxu0
    %v231 = vpop.f32.mrb[0].mxu0
    %v232 = vadd.f32 %v144, %v231
    %v233 = vpop.f32.mrb[0].mxu0
    %234 = vdwg.mxu0
    %235 = vst [vmem:[%s5] sm:$0xff] %v229
    %236 = vst [vmem:[%s5 + $0x8] sm:$0xff] %v232
    // Predicated region
    $region30: #{neural_net_forward.1} parent=1 // pred_check
      _
    $region31: #{neural_net_forward.1} parent=1 // pred_check_branch
      %238 = sbr.rel (0) target = $region33
    $region32: #{neural_net_forward.1} parent=1 // pred_region
      _
    $region33: #{neural_net_forward.1} parent=1 // pred_fallthru
      _
    // Predicated region
    $region34: #{neural_net_forward.1} parent=1 // pred_check
      _
    $region35: #{neural_net_forward.1} parent=1 // pred_check_branch
      %240 = sbr.rel (0) target = $region37
    $region36: #{neural_net_forward.1} parent=1 // pred_region
      _
    $region37: #{neural_net_forward.1} parent=1 // pred_fallthru
      _
    %241 = vsyncpa [#allocation3], 1
    %242 = vsyncpa [#allocation5], 1

</llo_original>
